<compile_context>
chip_gen: v6e
topology: v6e:2x2x1
jax: 0.10.0
libtpu: 0.0.40
codegen_flags: <defaults>
</compile_context>

<pallas_src>
import functools

import numpy as np
import jax
import jax.numpy as jnp
from jax.experimental import pallas as pl
from jax.experimental.pallas import tpu as pltpu


# ---------------------------------------------------------------------------
# Class-frequency derived per-class weights (deterministic, from __init__).
# ---------------------------------------------------------------------------
_C = 28
_CLASS_NUM = np.array(
    [12885, 1254, 3621, 1561 / 2, 1858, 2513 / 2, 1008 / 2, 2822, 53, 45, 28,
     1093, 688, 537, 1066, 21, 530, 210, 902, 1482 / 2, 172, 3777 / 2, 802,
     2965, 322, 8228 / 2, 328, 11],
    dtype=np.float64,
)
_CLASS_WEIGHT_1D = np.power(1.0 - _CLASS_NUM / 30000.0, 2).astype(np.float32)  # (28,)

_GROUP = 32                       # examples per lane-dense row
_ROW_LANES = _GROUP * _C          # 896 = 7 * 128  -> lane-dense last dim
# Resident weight row: class pattern repeated 32x, precomputed once (3.5 KiB).
_W_ROW_NP = np.tile(_CLASS_WEIGHT_1D, _GROUP).reshape(1, _ROW_LANES)

_TILE_ROWS = 1024                 # 1024 x 896 f32 = 3.5 MiB per input block
_NUM_PARTS = 2                    # leading "parallel" axis (2 TCs on v7x)
_VMEM_LIMIT = 32 * 1024 * 1024    # covers 2 inputs x 2 bufs + acc scratch everywhere


# ---------------------------------------------------------------------------
# Kernel: per-part elementwise accumulation of
#   -w * (t * clamp(log(x), -100) + (1-t) * clamp(log(1-x), -100))
# into a VMEM scratch; single reduce to the (1,1,1) per-part output at the end.
# ---------------------------------------------------------------------------
def _bce_sum_kernel(x_ref, t_ref, w_ref, out_ref, acc_ref, *,
                    tile_rows, valid_rows, steps_per_part, mask_possible):
    p = pl.program_id(0)
    i = pl.program_id(1)

    @pl.when(i == 0)
    def _():
        acc_ref[...] = jnp.zeros_like(acc_ref)

    # Native-dtype loads; cast on vregs (no f32 copy in HBM).
    x = x_ref[...].astype(jnp.float32)
    t = t_ref[...].astype(jnp.float32)
    w = w_ref[...]                                # (1, 896) f32, broadcasts over rows

    # Matches PyTorch F.binary_cross_entropy: log terms clamped at -100.
    log_x = jnp.maximum(jnp.log(x), -100.0)
    log_1mx = jnp.maximum(jnp.log(1.0 - x), -100.0)
    # t*log_x + (1-t)*log_1mx  ==  log_1mx + t*(log_x - log_1mx)   (one fewer mul)
    per = -(w * (log_1mx + t * (log_x - log_1mx)))

    if mask_possible:
        row0 = (p * steps_per_part + i) * tile_rows
        is_partial = row0 + tile_rows > valid_rows

        @pl.when(is_partial)
        def _():
            rows = row0 + jax.lax.broadcasted_iota(jnp.int32, per.shape, 0)
            # select (not multiply) so garbage rows can never leak NaN.
            acc_ref[...] += jnp.where(rows < valid_rows, per, 0.0)

        @pl.when(jnp.logical_not(is_partial))
        def _():
            acc_ref[...] += per
    else:
        acc_ref[...] += per

    @pl.when(i == pl.num_programs(1) - 1)
    def _():
        out_ref[...] = jnp.sum(acc_ref[...]).reshape(1, 1, 1)


def binary_entropy_loss_weight(inputs, targets, size_average=True):
    """Forward pass of BinaryEntropyLoss_weight (is_weight path).

    inputs, targets: (N, 28); inputs are probabilities in (0, 1).
    Returns a scalar float32 loss (mean if size_average else sum).
    """
    n, c = inputs.shape
    assert c == _C, f"expected C={_C}, got {c}"
    total_elems = n * c

    x, t = inputs, targets
    pad = (-n) % _GROUP
    if pad:
        # Padded rows (x=1, t=1) contribute exactly 0 loss.
        x = jnp.concatenate([x, jnp.ones((pad, c), x.dtype)], axis=0)
        t = jnp.concatenate([t, jnp.ones((pad, c), t.dtype)], axis=0)
    n_pad = n + pad

    # Free row-major reshape to the lane-dense layout (every vreg lane useful).
    r = (n_pad * c) // _ROW_LANES
    x2 = x.reshape(r, _ROW_LANES)
    t2 = t.reshape(r, _ROW_LANES)
    w_row = jnp.asarray(_W_ROW_NP)                # (1, 896) f32, 3.5 KiB resident

    tile_rows = r if r <= _TILE_ROWS else _TILE_ROWS
    nb = pl.cdiv(r, tile_rows)                    # blocks in the data
    steps_per_part = pl.cdiv(nb, _NUM_PARTS)
    mask_possible = (_NUM_PARTS * steps_per_part * tile_rows) != r

    last_block = nb - 1

    def data_map(p, i):
        # Clamp so a part with no remaining work re-reads the last block
        # (its contribution is fully masked to zero inside the kernel).
        return (jnp.minimum(p * steps_per_part + i, last_block), 0)

    kernel = functools.partial(
        _bce_sum_kernel,
        tile_rows=tile_rows,
        valid_rows=r,
        steps_per_part=steps_per_part,
        mask_possible=mask_possible,
    )

    bytes_in = int(x2.size) * x2.dtype.itemsize + int(t2.size) * t2.dtype.itemsize
    cost = pl.CostEstimate(
        flops=int(7 * n_pad * c),
        transcendentals=int(2 * n_pad * c),
        bytes_accessed=bytes_in + int(w_row.size) * 4 + _NUM_PARTS * 4,
    )

    out = pl.pallas_call(
        kernel,
        out_shape=jax.ShapeDtypeStruct((_NUM_PARTS, 1, 1), jnp.float32),
        grid_spec=pltpu.PrefetchScalarGridSpec(
            num_scalar_prefetch=0,
            grid=(_NUM_PARTS, steps_per_part),
            in_specs=[
                pl.BlockSpec((tile_rows, _ROW_LANES), data_map),
                pl.BlockSpec((tile_rows, _ROW_LANES), data_map),
                pl.BlockSpec((1, _ROW_LANES), lambda p, i: (0, 0)),   # resident weight
            ],
            out_specs=pl.BlockSpec((1, 1, 1), lambda p, i: (p, 0, 0)),
            scratch_shapes=[pltpu.VMEM((tile_rows, _ROW_LANES), jnp.float32)],
        ),
        compiler_params=pltpu.CompilerParams(
            dimension_semantics=("parallel", "arbitrary"),
            vmem_limit_bytes=_VMEM_LIMIT,
        ),
        cost_estimate=cost,
    )(x2, t2, w_row)

    total = jnp.sum(out)                          # sum the per-part partials
    if size_average:
        return total / jnp.float32(total_elems)
    return total


# ---------------------------------------------------------------------------
# Pure-JAX reference for validation.
# ---------------------------------------------------------------------------
def _reference(inputs, targets, size_average=True):
    n, c = inputs.shape
    x = inputs.astype(jnp.float32)
    t = targets.astype(jnp.float32)
    w = jnp.broadcast_to(jnp.asarray(_CLASS_WEIGHT_1D).reshape(1, c), (n, c))
    per = -w * (t * jnp.maximum(jnp.log(x), -100.0)
                + (1.0 - t) * jnp.maximum(jnp.log(1.0 - x), -100.0))
    return jnp.mean(per) if size_average else jnp.sum(per)


if __name__ == "__main__":
    key = jax.random.PRNGKey(0)
    k1, k2, k3, k4 = jax.random.split(key, 4)

    # Case 1: batch multiple of 32 -> no padding needed.
    n1 = 64
    x1 = jax.nn.sigmoid(jax.random.normal(k1, (n1, _C), dtype=jnp.float32))
    t1 = (jax.random.uniform(k2, (n1, _C)) > 0.5).astype(jnp.float32)
    loss1 = binary_entropy_loss_weight(x1, t1, size_average=True)
    jax.block_until_ready(loss1)
    ref1 = _reference(x1, t1, True)
    assert jnp.allclose(loss1, ref1, rtol=1e-5, atol=1e-6), (loss1, ref1)

    sum1 = binary_entropy_loss_weight(x1, t1, size_average=False)
    jax.block_until_ready(sum1)
    refs1 = _reference(x1, t1, False)
    assert jnp.allclose(sum1, refs1, rtol=1e-5, atol=1e-5), (sum1, refs1)

    # Case 2: small odd batch -> padded to 32 rows (zero-loss padding).
    n2 = 6
    x2 = jax.nn.sigmoid(jax.random.normal(k3, (n2, _C), dtype=jnp.float32))
    t2 = (jax.random.uniform(k4, (n2, _C)) > 0.5).astype(jnp.float32)
    loss2 = binary_entropy_loss_weight(x2, t2, size_average=True)
    jax.block_until_ready(loss2)
    ref2 = _reference(x2, t2, True)
    assert jnp.allclose(loss2, ref2, rtol=1e-5, atol=1e-6), (loss2, ref2)

    # Case 3: bf16 inputs stay bf16 in HBM (native-dtype path, cast in-kernel).
    x3 = x1.astype(jnp.bfloat16)
    t3 = t1.astype(jnp.bfloat16)
    loss3 = binary_entropy_loss_weight(x3, t3, size_average=True)
    jax.block_until_ready(loss3)
    ref3 = _reference(x3, t3, True)
    assert jnp.allclose(loss3, ref3, rtol=1e-4, atol=1e-5), (loss3, ref3)

    print("KERNEL_OK")
</pallas_src>

<mosaic_0001>
module attributes {stable_mosaic.version = 11 : i64} {
  func.func @_bce_sum_kernel(%arg0: i32, %arg1: i32, %arg2: memref<2x896xf32, #tpu.memory_space<vmem>>, %arg3: memref<2x896xf32, #tpu.memory_space<vmem>>, %arg4: memref<1x896xf32, #tpu.memory_space<vmem>>, %arg5: memref<1x1x1xf32, #tpu.memory_space<vmem>>, %arg6: memref<2x896xf32, #tpu.memory_space<vmem>>) attributes {dimension_semantics = [#tpu.dimension_semantics<parallel>, #tpu.dimension_semantics<arbitrary>], iteration_bounds = array<i64: 2, 1>, scalar_prefetch = 0 : i64, scratch_operands = 1 : i64, tpu.core_type = #tpu.core_type<tc>, window_params = [{transform_indices = @transform_0, window_bounds = array<i64: 2, 896>}, {transform_indices = @transform_1, window_bounds = array<i64: 2, 896>}, {pipeline_mode = #tpu.pipeline_mode<synchronous>, transform_indices = @transform_2, window_bounds = array<i64: 1, 896>}, {transform_indices = @transform_3, window_bounds = array<i64: 1, 1, 1>}]} {
    %c0_i32 = arith.constant 0 : i32
    %0 = arith.cmpi eq, %arg1, %c0_i32 : i32
    %1 = arith.extui %0 : i1 to i32
    %c0_i32_0 = arith.constant 0 : i32
    %2 = arith.cmpi ne, %1, %c0_i32_0 : i32
    scf.if %2 {
      %cst_15 = arith.constant 0.000000e+00 : f32
      %34 = vector.broadcast %cst_15 : f32 to vector<2x896xf32>
      %c0_16 = arith.constant 0 : index
      %c0_17 = arith.constant 0 : index
      %35 = vector.load %arg6[%c0_16, %c0_17] : memref<2x896xf32, #tpu.memory_space<vmem>>, vector<2x896xf32>
      tpu.vector_store %arg6[%c0_16, %c0_17], %34 {strides = array<i32>} : memref<2x896xf32, #tpu.memory_space<vmem>>, vector<2x896xf32>,
    } else {
    }
    %c0 = arith.constant 0 : index
    %c0_1 = arith.constant 0 : index
    %3 = vector.load %arg2[%c0, %c0_1] : memref<2x896xf32, #tpu.memory_space<vmem>>, vector<2x896xf32>
    %c0_2 = arith.constant 0 : index
    %c0_3 = arith.constant 0 : index
    %4 = vector.load %arg3[%c0_2, %c0_3] : memref<2x896xf32, #tpu.memory_space<vmem>>, vector<2x896xf32>
    %c0_4 = arith.constant 0 : index
    %c0_5 = arith.constant 0 : index
    %5 = vector.load %arg4[%c0_4, %c0_5] : memref<1x896xf32, #tpu.memory_space<vmem>>, vector<1x896xf32>
    %6 = math.log %3 : vector<2x896xf32>
    %cst = arith.constant -1.000000e+02 : f32
    %7 = vector.broadcast %cst : f32 to vector<2x896xf32>
    %8 = arith.maximumf %6, %7 : vector<2x896xf32>
    %cst_6 = arith.constant 1.000000e+00 : f32
    %9 = vector.broadcast %cst_6 : f32 to vector<2x896xf32>
    %10 = arith.subf %9, %3 : vector<2x896xf32>
    %11 = math.log %10 : vector<2x896xf32>
    %cst_7 = arith.constant -1.000000e+02 : f32
    %12 = vector.broadcast %cst_7 : f32 to vector<2x896xf32>
    %13 = arith.maximumf %11, %12 : vector<2x896xf32>
    %14 = arith.subf %8, %13 : vector<2x896xf32>
    %15 = arith.mulf %4, %14 : vector<2x896xf32>
    %16 = arith.addf %13, %15 : vector<2x896xf32>
    %17 = vector.broadcast %5 : vector<1x896xf32> to vector<2x896xf32>
    %18 = arith.mulf %17, %16 : vector<2x896xf32>
    %cst_8 = arith.constant 0.000000e+00 : f32
    %19 = vector.broadcast %cst_8 : f32 to vector<2x896xf32>
    %20 = arith.subf %19, %18 : vector<2x896xf32>
    %c1_i32 = arith.constant 1 : i32
    %21 = arith.muli %arg0, %c1_i32 : i32
    %22 = arith.addi %21, %arg1 : i32
    %c2_i32 = arith.constant 2 : i32
    %23 = arith.muli %22, %c2_i32 : i32
    %c2_i32_9 = arith.constant 2 : i32
    %24 = arith.addi %23, %c2_i32_9 : i32
    %c2_i32_10 = arith.constant 2 : i32
    %25 = arith.cmpi sgt, %24, %c2_i32_10 : i32
    %26 = arith.extui %25 : i1 to i32
    %c0_i32_11 = arith.constant 0 : i32
    %27 = arith.cmpi ne, %26, %c0_i32_11 : i32
    scf.if %27 {
      %34 = tpu.iota {dimensions = array<i32: 0>} : vector<2x896xi32>
      %35 = vector.broadcast %23 : i32 to vector<2x896xi32>
      %36 = arith.addi %35, %34 : vector<2x896xi32>
      %c0_15 = arith.constant 0 : index
      %c0_16 = arith.constant 0 : index
      %37 = vector.load %arg6[%c0_15, %c0_16] : memref<2x896xf32, #tpu.memory_space<vmem>>, vector<2x896xf32>
      %c2_i32_17 = arith.constant 2 : i32
      %38 = vector.broadcast %c2_i32_17 : i32 to vector<2x896xi32>
      %39 = arith.cmpi slt, %36, %38 : vector<2x896xi32>
      %cst_18 = arith.constant 0.000000e+00 : f32
      %40 = vector.broadcast %cst_18 : f32 to vector<2x896xf32>
      %41 = arith.select %39, %20, %40 : vector<2x896xi1>, vector<2x896xf32>
      %42 = arith.addf %37, %41 : vector<2x896xf32>
      %c0_19 = arith.constant 0 : index
      %c0_20 = arith.constant 0 : index
      %43 = vector.load %arg6[%c0_19, %c0_20] : memref<2x896xf32, #tpu.memory_space<vmem>>, vector<2x896xf32>
      tpu.vector_store %arg6[%c0_19, %c0_20], %42 {strides = array<i32>} : memref<2x896xf32, #tpu.memory_space<vmem>>, vector<2x896xf32>,
    } else {
    }
    %true = arith.constant true
    %28 = arith.xori %25, %true : i1
    %29 = arith.extui %28 : i1 to i32
    %c0_i32_12 = arith.constant 0 : i32
    %30 = arith.cmpi ne, %29, %c0_i32_12 : i32
    scf.if %30 {
      %c0_15 = arith.constant 0 : index
      %c0_16 = arith.constant 0 : index
      %34 = vector.load %arg6[%c0_15, %c0_16] : memref<2x896xf32, #tpu.memory_space<vmem>>, vector<2x896xf32>
      %35 = arith.addf %34, %20 : vector<2x896xf32>
      %c0_17 = arith.constant 0 : index
      %c0_18 = arith.constant 0 : index
      %36 = vector.load %arg6[%c0_17, %c0_18] : memref<2x896xf32, #tpu.memory_space<vmem>>, vector<2x896xf32>
      tpu.vector_store %arg6[%c0_17, %c0_18], %35 {strides = array<i32>} : memref<2x896xf32, #tpu.memory_space<vmem>>, vector<2x896xf32>,
    } else {
    }
    %c0_i32_13 = arith.constant 0 : i32
    %31 = arith.cmpi eq, %arg1, %c0_i32_13 : i32
    %32 = arith.extui %31 : i1 to i32
    %c0_i32_14 = arith.constant 0 : i32
    %33 = arith.cmpi ne, %32, %c0_i32_14 : i32
    scf.if %33 {
      %c0_15 = arith.constant 0 : index
      %c0_16 = arith.constant 0 : index
      %34 = vector.load %arg6[%c0_15, %c0_16] : memref<2x896xf32, #tpu.memory_space<vmem>>, vector<2x896xf32>
      %35 = vector.shape_cast %34 : vector<2x896xf32> to vector<1x2x896xf32>
      %cst_17 = arith.constant dense<0.000000e+00> : vector<1xf32>
      %36 = vector.multi_reduction <add>, %35, %cst_17 [1, 2] : vector<1x2x896xf32> to vector<1xf32>
      %37 = vector.shape_cast %36 : vector<1xf32> to vector<1x1x1xf32>
      %38 = vector.extract %37[0, 0, 0] : f32 from vector<1x1x1xf32>
      %39 = vector.broadcast %38 : f32 to vector<1x1x1xf32>
      %c0_18 = arith.constant 0 : index
      %c0_19 = arith.constant 0 : index
      %c0_20 = arith.constant 0 : index
      %40 = vector.load %arg5[%c0_18, %c0_19, %c0_20] : memref<1x1x1xf32, #tpu.memory_space<vmem>>, vector<1x1x1xf32>
      tpu.vector_store %arg5[%c0_18, %c0_19, %c0_20], %39 {strides = array<i32>} : memref<1x1x1xf32, #tpu.memory_space<vmem>>, vector<1x1x1xf32>,
    } else {
    }
    return
  }
  func.func @transform_0(%arg0: i32, %arg1: i32) -> (i32, i32) {
    %c1_i32 = arith.constant 1 : i32
    %0 = arith.muli %arg0, %c1_i32 : i32
    %1 = arith.addi %0, %arg1 : i32
    %c0_i32 = arith.constant 0 : i32
    %2 = arith.minsi %1, %c0_i32 : i32
    %c0_i32_0 = arith.constant 0 : i32
    %c0_i32_1 = arith.constant 0 : i32
    return %2, %c0_i32_0 : i32, i32
  }
  func.func @transform_1(%arg0: i32, %arg1: i32) -> (i32, i32) {
    %c1_i32 = arith.constant 1 : i32
    %0 = arith.muli %arg0, %c1_i32 : i32
    %1 = arith.addi %0, %arg1 : i32
    %c0_i32 = arith.constant 0 : i32
    %2 = arith.minsi %1, %c0_i32 : i32
    %c0_i32_0 = arith.constant 0 : i32
    %c0_i32_1 = arith.constant 0 : i32
    return %2, %c0_i32_0 : i32, i32
  }
  func.func @transform_2(%arg0: i32, %arg1: i32) -> (i32, i32) {
    %c0_i32 = arith.constant 0 : i32
    %c0_i32_0 = arith.constant 0 : i32
    %c0_i32_1 = arith.constant 0 : i32
    return %c0_i32, %c0_i32_0 : i32, i32
  }
  func.func @transform_3(%arg0: i32, %arg1: i32) -> (i32, i32, i32) {
    %c0_i32 = arith.constant 0 : i32
    %c0_i32_0 = arith.constant 0 : i32
    %c0_i32_1 = arith.constant 0 : i32
    return %arg0, %c0_i32, %c0_i32_0 : i32, i32, i32
  }
}

</mosaic_0001>

<llo_original>
// kernel: tpu_custom_call.1
$region0: #{tpu_custom_call.1}
  #allocation0 [shape = 'u32[]', space=smem, size = 0x4, offset = 0x4, fixed_abs, tag = 'smem constant byte address 0x4 - core index']
  #allocation1 [shape = 'u32[144,128]{1,0:T(1,128)}', space=vmem, size = 0x12000, scoped, tag = 'internal scratch']
  #allocation2 [shape = 'f32[2,896]{1,0:T(2,128)}', space=vmem, size = 0x1c00, scoped, tag = 'scratch operand']
  %s0 = inlined_call_operand.hbm [shape: f32[2,896], index: 0, kind: input, shape index: {}]
  %s1 = inlined_call_operand.hbm [shape: f32[2,896], index: 1, kind: input, shape index: {}]
  %s2 = inlined_call_operand.hbm [shape: f32[1,896], index: 2, kind: input, shape index: {}]
  %s3 = inlined_call_operand.vmem [shape: f32[2,1,1], index: 3, kind: output, shape index: {}]
  %s4 = sld [smem:[#allocation0]]
  $region73: #{tpu_custom_call.1} parent=0
    _
  %s6 = ssub.s32 1, %s4
  %s7 = scalar_select 0, %s6, %s4
  $region1: #{tpu_custom_call.1} parent=0
    #allocation3 [shape = 'u8[14336]{0}', space=vmem, size = 0x3800, scoped, tag = 'input window, operand 0']
    #allocation4 [shape = 's32[2]{0}', space=sflag, size = 0x8, scoped, tag = 'scoped memory for tpu_custom_call.1']
    #allocation5 [shape = 'u8[14336]{0}', space=vmem, size = 0x3800, scoped, tag = 'input window, operand 1']
    #allocation6 [shape = 's32[2]{0}', space=sflag, size = 0x8, scoped, tag = 'scoped memory for tpu_custom_call.1']
    #allocation7 [shape = 'u8[3584]{0}', space=vmem, size = 0x1000, scoped, tag = 'input window, operand 2, single buffered']
    %8 = vsyncpa [#allocation4], 0
    %s9 = scalar_lea.sflag [#allocation4], 1
    %10 = vsyncpa %s9, 0
    %11 = vsyncpa [#allocation6], 0
    %s12 = scalar_lea.sflag [#allocation6], 1
    %13 = vsyncpa %s12, 0
    loop: start=0, step=1, limit=4
    $region2: #{tpu_custom_call.1} parent=1 // loop_pre_header
      _
    $region3: #{tpu_custom_call.1} parent=1 // loop_header
      %s15 = sphi 0, %s19
      %p16 = scmp.ge.s32.totalorder %s15, 4
      %s22 = sphi 0, %s34
      %s23 = sphi 0, %s30
      %s24 = sphi 0, %s22
      %s25 = sphi 0, %s23
      %s26 = sphi 0, %s24
      %s27 = sphi 0, %s25
      %s43 = sphi 0, %s45
      %s46 = sphi 0, %s43
      %s47 = sphi 0, %s46
      %s63 = sphi 0, %s47
      %s75 = sphi 0, %s77
      %s78 = sphi 0, %s75
      %s79 = sphi 0, %s78
      %s95 = sphi 0, %s79
      %s99 = sphi 0, %s99
      %s101 = sphi 0, %s99
      %s102 = sphi 0, %s101
      %s116 = sphi 0, %s102
      %s122 = sphi 0, %s124
      %s125 = sphi 0, %s122
      %s126 = sphi 0, %s125
      %s142 = sphi 0, %s126
    $region4: #{tpu_custom_call.1} parent=1 // loop_header_branch
      %18 = sbr.rel (%p16) target = $region8
    $region5: #{tpu_custom_call.1} parent=1 // loop_body
      %s20 = ssub.s32 %s15, 1
      %s21 = ssub.s32 %s15, 2
      %s28 = sadd.s32 1, %s23
      %p29 = scmp.ge.s32.totalorder %s28, 1
      %s30 = scalar_select %p29, 0, %s28
      %s31 = sadd.s32 1, %s22
      %s32 = scalar_select %p29, %s31, %s22
      %p33 = scmp.ge.s32.totalorder %s32, 2
      %s34 = scalar_select %p33, 0, %s32
      %s35 = sadd.s32 %s22, %s23
      %p36 = scmp.lt.s32.totalorder %s35, 0
      %s37 = scalar_select %p36, %s35, 0
      %s38 = sadd.s32 %s34, %s30
      %p39 = scmp.lt.s32.totalorder %s38, 0
      %s40 = scalar_select %p39, %s38, 0
      %s41 = ssub.s32 %s37, %s40
      %p42 = scmp.eq.s32.totalorder %s41, 0
      %s44 = sadd.s32 %s43, 1
      %s45 = scalar_select %p42, %s43, %s44
      %p48 = pneg %p42
      %p49 = scmp.eq.s32.totalorder %s15, 1
      %p50 = por %p48, %p49
      %p51 = scmp.ne.s32.totalorder %s43, %s46
      %p52 = scmp.eq.s32.totalorder %s15, 0
      %p53 = por %p51, %p52
      %p54 = scmp.ne.s32.totalorder %s43, %s46
      %p55 = scmp.eq.s32.totalorder %s20, 1
      %p56 = por %p54, %p55
      %p57 = scmp.ne.s32.totalorder %s46, %s47
      %p58 = scmp.eq.s32.totalorder %s20, 0
      %p59 = por %p57, %p58
      %p60 = scmp.ne.s32.totalorder %s46, %s47
      %p61 = scmp.eq.s32.totalorder %s21, 1
      %p62 = por %p60, %p61
      %p64 = scmp.ne.s32.totalorder %s47, %s63
      %p65 = scmp.eq.s32.totalorder %s21, 0
      %p66 = por %p64, %p65
      %s67 = sadd.s32 %s22, %s23
      %p68 = scmp.lt.s32.totalorder %s67, 0
      %s69 = scalar_select %p68, %s67, 0
      %s70 = sadd.s32 %s34, %s30
      %p71 = scmp.lt.s32.totalorder %s70, 0
      %s72 = scalar_select %p71, %s70, 0
      %s73 = ssub.s32 %s69, %s72
      %p74 = scmp.eq.s32.totalorder %s73, 0
      %s76 = sadd.s32 %s75, 1
      %s77 = scalar_select %p74, %s75, %s76
      %p80 = pneg %p74
      %p81 = scmp.eq.s32.totalorder %s15, 1
      %p82 = por %p80, %p81
      %p83 = scmp.ne.s32.totalorder %s75, %s78
      %p84 = scmp.eq.s32.totalorder %s15, 0
      %p85 = por %p83, %p84
      %p86 = scmp.ne.s32.totalorder %s75, %s78
      %p87 = scmp.eq.s32.totalorder %s20, 1
      %p88 = por %p86, %p87
      %p89 = scmp.ne.s32.totalorder %s78, %s79
      %p90 = scmp.eq.s32.totalorder %s20, 0
      %p91 = por %p89, %p90
      %p92 = scmp.ne.s32.totalorder %s78, %s79
      %p93 = scmp.eq.s32.totalorder %s21, 1
      %p94 = por %p92, %p93
      %p96 = scmp.ne.s32.totalorder %s79, %s95
      %p97 = scmp.eq.s32.totalorder %s21, 0
      %p98 = por %p96, %p97
      %s100 = sadd.s32 %s99, 1
      %p103 = scmp.eq.s32.totalorder %s15, 1
      %p104 = scmp.ne.s32.totalorder %s99, %s101
      %p105 = scmp.eq.s32.totalorder %s15, 0
      %p106 = por %p104, %p105
      %p107 = scmp.ne.s32.totalorder %s99, %s101
      %p108 = scmp.eq.s32.totalorder %s20, 1
      %p109 = por %p107, %p108
      %p110 = scmp.ne.s32.totalorder %s101, %s102
      %p111 = scmp.eq.s32.totalorder %s20, 0
      %p112 = por %p110, %p111
      %p113 = scmp.ne.s32.totalorder %s101, %s102
      %p114 = scmp.eq.s32.totalorder %s21, 1
      %p115 = por %p113, %p114
      %p117 = scmp.ne.s32.totalorder %s102, %s116
      %p118 = scmp.eq.s32.totalorder %s21, 0
      %p119 = por %p117, %p118
      %s120 = ssub.s32 %s22, %s34
      %p121 = scmp.eq.s32.totalorder %s120, 0
      %s123 = sadd.s32 %s122, 1
      %s124 = scalar_select %p121, %s122, %s123
      %p127 = pneg %p121
      %p128 = scmp.eq.s32.totalorder %s15, 1
      %p129 = por %p127, %p128
      %p130 = scmp.ne.s32.totalorder %s122, %s125
      %p131 = scmp.eq.s32.totalorder %s15, 0
      %p132 = por %p130, %p131
      %p133 = scmp.ne.s32.totalorder %s122, %s125
      %p134 = scmp.eq.s32.totalorder %s20, 1
      %p135 = por %p133, %p134
      %p136 = scmp.ne.s32.totalorder %s125, %s126
      %p137 = scmp.eq.s32.totalorder %s20, 0
      %p138 = por %p136, %p137
      %p139 = scmp.ne.s32.totalorder %s125, %s126
      %p140 = scmp.eq.s32.totalorder %s21, 1
      %p141 = por %p139, %p140
      %p143 = scmp.ne.s32.totalorder %s126, %s142
      %p144 = scmp.eq.s32.totalorder %s21, 0
      %p145 = por %p143, %p144
      %p146 = scmp.le.s32.totalorder 1, %s15
      %p147 = scmp.lt.s32.totalorder %s15, 3
      %p148 = pnand %p146, %p147
      %p149 = pneg %p148
      // Predicated region
      $region9: #{tpu_custom_call.1} parent=5 // pred_check
        _
      $region10: #{tpu_custom_call.1} parent=5 // pred_check_branch
        %151 = sbr.rel (%p148) target = $region12
      $region11: #{tpu_custom_call.1} parent=5 // pred_region
        %s152 = ssub.s32 %s15, 1
        // Predicated region
        $region13: #{tpu_custom_call.1} parent=11 // pred_check
          %p153 = pneg %p112
        $region14: #{tpu_custom_call.1} parent=11 // pred_check_branch
          %155 = sbr.rel (%p153) target = $region16
        $region15: #{tpu_custom_call.1} parent=11 // pred_region
          %s157 = ssub.s32 112, 112
          %158 = vsyncadd [#allocation6], %s157
          %s160 = sshll.u32 [#allocation7], 4
          %s161 = int_to_ptr.vmem [resolvable:$true] %s160
          %163 = dma.hbm_to_vmem [thread:$0]  %s2, 112, %s161, [#allocation6]
        $region16: #{tpu_custom_call.1} parent=11 // pred_fallthru
          _
      $region12: #{tpu_custom_call.1} parent=5 // pred_fallthru
        _
      %p164 = scmp.lt.s32.totalorder %s15, 2
      // Predicated region
      $region17: #{tpu_custom_call.1} parent=5 // pred_check
        %p165 = pneg %p164
      $region18: #{tpu_custom_call.1} parent=5 // pred_check_branch
        %167 = sbr.rel (%p165) target = $region20
      $region19: #{tpu_custom_call.1} parent=5 // pred_region
        // Predicated region
        $region21: #{tpu_custom_call.1} parent=19 // pred_check
          %p168 = pneg %p53
        $region22: #{tpu_custom_call.1} parent=19 // pred_check_branch
          %170 = sbr.rel (%p168) target = $region24
        $region23: #{tpu_custom_call.1} parent=19 // pred_region
          %s171 = sand.u32 %s43, 1
          %s172 = scalar_lea.sflag [#allocation4], %s171
          %s173 = sand.u32 %s43, 1
          %s174 = smul.addr %s173, 14
          %s175 = scalar_lea.vmem [#allocation3], %s174
          %s176 = sadd.s32 %s22, %s23
          %p177 = scmp.lt.s32.totalorder %s176, 0
          %s178 = scalar_select %p177, %s176, 0
          %s180 = ssub.s32 224, 224
          %181 = vsyncadd %s172, %s180
          %s182 = smul.addr %s178, 7
          %s183 = smul.addr %s182, 32
          %s184 = scalar_lea.hbm %s0, %s183
          %s186 = sshll.u32 %s175, 4
          %s187 = int_to_ptr.vmem [resolvable:$true] %s186
          %189 = dma.hbm_to_vmem [thread:$0]  %s184, 224, %s187, %s172
        $region24: #{tpu_custom_call.1} parent=19 // pred_fallthru
          _
        // Predicated region
        $region25: #{tpu_custom_call.1} parent=19 // pred_check
          %p190 = pneg %p85
        $region26: #{tpu_custom_call.1} parent=19 // pred_check_branch
          %192 = sbr.rel (%p190) target = $region28
        $region27: #{tpu_custom_call.1} parent=19 // pred_region
          %s193 = sand.u32 %s15, 1
          %s194 = scalar_lea.sflag [#allocation6], %s193
          %s195 = sand.u32 %s75, 1
          %s196 = smul.addr %s195, 14
          %s197 = scalar_lea.vmem [#allocation5], %s196
          %s198 = sadd.s32 %s22, %s23
          %p199 = scmp.lt.s32.totalorder %s198, 0
          %s200 = scalar_select %p199, %s198, 0
          %s202 = ssub.s32 224, 224
          %203 = vsyncadd %s194, %s202
          %s204 = smul.addr %s200, 7
          %s205 = smul.addr %s204, 32
          %s206 = scalar_lea.hbm %s1, %s205
          %s208 = sshll.u32 %s197, 4
          %s209 = int_to_ptr.vmem [resolvable:$true] %s208
          %211 = dma.hbm_to_vmem [thread:$0]  %s206, 224, %s209, %s194
        $region28: #{tpu_custom_call.1} parent=19 // pred_fallthru
          _
      $region20: #{tpu_custom_call.1} parent=5 // pred_fallthru
        _
      %p212 = scmp.le.s32.totalorder 1, %s15
      %p213 = scmp.lt.s32.totalorder %s15, 3
      %p214 = pnand %p212, %p213
      %p215 = pneg %p214
      // Predicated region
      $region29: #{tpu_custom_call.1} parent=5 // pred_check
        _
      $region30: #{tpu_custom_call.1} parent=5 // pred_check_branch
        %217 = sbr.rel (%p214) target = $region32
      $region31: #{tpu_custom_call.1} parent=5 // pred_region
        %s218 = ssub.s32 %s15, 1
        %s219 = sand.u32 %s46, 1
        %s220 = scalar_lea.sflag [#allocation4], %s219
        %s221 = sand.u32 %s46, 1
        %s222 = smul.addr %s221, 14
        %s223 = scalar_lea.vmem [#allocation3], %s222
        // Predicated region
        $region33: #{tpu_custom_call.1} parent=31 // pred_check
          %p224 = pneg %p59
        $region34: #{tpu_custom_call.1} parent=31 // pred_check_branch
          %226 = sbr.rel (%p224) target = $region36
        $region35: #{tpu_custom_call.1} parent=31 // pred_region
          %227 = dma.done %s220, 224
        $region36: #{tpu_custom_call.1} parent=31 // pred_fallthru
          _
        %s228 = sand.u32 %s20, 1
        %s229 = scalar_lea.sflag [#allocation6], %s228
        %s230 = sand.u32 %s78, 1
        %s231 = smul.addr %s230, 14
        %s232 = scalar_lea.vmem [#allocation5], %s231
        // Predicated region
        $region37: #{tpu_custom_call.1} parent=31 // pred_check
          %p233 = pneg %p91
        $region38: #{tpu_custom_call.1} parent=31 // pred_check_branch
          %235 = sbr.rel (%p233) target = $region40
        $region39: #{tpu_custom_call.1} parent=31 // pred_region
          %236 = dma.done %s229, 224
        $region40: #{tpu_custom_call.1} parent=31 // pred_fallthru
          _
        // Predicated region
        $region41: #{tpu_custom_call.1} parent=31 // pred_check
          %p237 = pneg %p112
        $region42: #{tpu_custom_call.1} parent=31 // pred_check_branch
          %239 = sbr.rel (%p237) target = $region44
        $region43: #{tpu_custom_call.1} parent=31 // pred_region
          %240 = dma.done [#allocation6], 112
        $region44: #{tpu_custom_call.1} parent=31 // pred_fallthru
          _
        %s241 = sand.u32 %s46, 1
        %s242 = scalar_lea.sflag [#allocation4], %s241
        %s243 = sand.u32 %s46, 1
        %s244 = smul.addr %s243, 14
        %s245 = scalar_lea.vmem [#allocation3], %s244
        %p246 = pneg %p59
        %p247 = pneg %p56
        %s248 = sand.u32 %s20, 1
        %s249 = scalar_lea.sflag [#allocation6], %s248
        %s250 = sand.u32 %s78, 1
        %s251 = smul.addr %s250, 14
        %s252 = scalar_lea.vmem [#allocation5], %s251
        %p253 = pneg %p91
        %p254 = pneg %p88
        %p255 = pneg %p112
        %p256 = pneg %p109
        %p257 = pneg %p138
        %p258 = pneg %p135
        %p259 = scmp.lt.s32.totalorder %s24, 1
        %s260 = scalar_select %p259, %s24, 1
        %s261 = scalar_lea.vmem %s3, %s260
        %s262 = sadd.s32 %s24, %s25
        %p263 = scmp.lt.s32.totalorder %s262, 0
        %s264 = scalar_select %p263, %s262, 0
        %s265 = sadd.s32 %s24, %s25
        %p266 = scmp.lt.s32.totalorder %s265, 0
        %s267 = scalar_select %p266, %s265, 0
        %p268 = scmp.lt.s32.totalorder %s24, 1
        %s269 = scalar_select %p268, %s24, 1
        %s270 = scalar_lea.vmem %s3, %s269
        %p271 = scmp.eq.s32.totalorder %s25, 0
        // Predicated region
        $region45: #{tpu_custom_call.1} parent=31 // pred_check
          %p272 = pneg %p271
        $region46: #{tpu_custom_call.1} parent=31 // pred_check_branch
          %274 = sbr.rel (%p272) target = $region48
        $region47: #{tpu_custom_call.1} parent=31 // pred_region
          %275 = vst [vmem:[#allocation2] sm:$0xff] 0.0
          %276 = vst [vmem:[#allocation2 + $0x8] sm:$0x3f] 0.0
        $region48: #{tpu_custom_call.1} parent=31 // pred_fallthru
          _
        %v277 = vld [vmem:[%s223] sm:$0xff]
        %v278 = vld [vmem:[%s223 + $0x8] sm:$0x3f]
        %v279 = vld [vmem:[%s232] sm:$0xff]
        %v280 = vld [vmem:[%s232 + $0x8] sm:$0x3f]
        %v281 = vld [vmem:[#allocation7] sm:$0xff]
        %v282 = vlog2.pop %v277
        %v283 = vmul.f32 %v282, 0.6931472
        %v284 = vlog2.pop %v278
        %v285 = vmul.f32 %v284, 0.6931472
        %v286 = vmax.f32 %v283, -100.0
        %v287 = vmax.f32 %v285, -100.0
        %v288 = vsub.f32 1.0, %v277
        %v289 = vsub.f32 1.0, %v278
        %v290 = vlog2.pop %v288
        %v291 = vmul.f32 %v290, 0.6931472
        %v292 = vlog2.pop %v289
        %v293 = vmul.f32 %v292, 0.6931472
        %v294 = vmax.f32 %v291, -100.0
        %v295 = vmax.f32 %v293, -100.0
        %v296 = vsub.f32 %v286, %v294
        %v297 = vsub.f32 %v287, %v295
        %v298 = vmul.f32 %v279, %v296
        %v299 = vmul.f32 %v280, %v297
        %v300 = vadd.f32 %v294, %v298
        %v301 = vadd.f32 %v295, %v299
        %v303 = vlaneseq
        %v304 = vshrl.u32 %v303, 7
        %v305 = vsub.s32 0, %v304
        %v306 = vrot.slane %v281, %v305
        %v307 = vlaneseq
        %v308 = vshrl.u32 %v307, 7
        %v309 = vsub.s32 1, %v308
        %v310 = vrot.slane %v281, %v309
        %v311 = vlaneseq
        %v312 = vshrl.u32 %v311, 7
        %v313 = vsub.s32 2, %v312
        %v314 = vrot.slane %v281, %v313
        %v315 = vlaneseq
        %v316 = vshrl.u32 %v315, 7
        %v317 = vsub.s32 3, %v316
        %v318 = vrot.slane %v281, %v317
        %v319 = vlaneseq
        %v320 = vshrl.u32 %v319, 7
        %v321 = vsub.s32 4, %v320
        %v322 = vrot.slane %v281, %v321
        %v323 = vlaneseq
        %v324 = vshrl.u32 %v323, 7
        %v325 = vsub.s32 5, %v324
        %v326 = vrot.slane %v281, %v325
        %v327 = vlaneseq
        %v328 = vshrl.u32 %v327, 7
        %v329 = vsub.s32 6, %v328
        %v330 = vrot.slane %v281, %v329
        %v340 = vcombine.high %v300, %v300
        %v342 = vunpack.c.l.s4 1983009808
        %v343 = vunpack.c.0.s8 %v342
        %v344 = vlaneseq
        %v345 = vshrl.u32 %v344, 7
        %v346 = vsub.s32 %v343, %v345
        %v347 = vrot.slane %v300, %v346
        %v349 = vunpack.c.l.s4 1983009808
        %v350 = vunpack.c.0.s8 %v349
        %v351 = vlaneseq
        %v352 = vshrl.u32 %v351, 7
        %v353 = vsub.s32 %v350, %v352
        %v354 = vrot.slane %v340, %v353
        %v355 = vcombine.high %v347, %v347
        %v356 = vcombine.high %v354, %v354
        %v357 = vcombine.high %v301, %v301
        %v359 = vunpack.c.l.s4 1983009808
        %v360 = vunpack.c.0.s8 %v359
        %v361 = vlaneseq
        %v362 = vshrl.u32 %v361, 7
        %v363 = vsub.s32 %v360, %v362
        %v364 = vrot.slane %v301, %v363
        %v366 = vunpack.c.l.s4 1983009808
        %v367 = vunpack.c.0.s8 %v366
        %v368 = vlaneseq
        %v369 = vshrl.u32 %v368, 7
        %v370 = vsub.s32 %v367, %v369
        %v371 = vrot.slane %v357, %v370
        %v372 = vcombine.high %v364, %v364
        %v380 = vmul.f32 %v306, %v347
        %v381 = vmul.f32 %v310, %v355
        %v382 = vmul.f32 %v314, %v354
        %v383 = vmul.f32 %v318, %v356
        %v384 = vmul.f32 %v322, %v364
        %v385 = vmul.f32 %v326, %v372
        %v386 = vmul.f32 %v330, %v371
        %v387 = vsub.f32 0.0, %v380
        %v388 = vsub.f32 0.0, %v381
        %v389 = vsub.f32 0.0, %v382
        %v390 = vsub.f32 0.0, %v383
        %v391 = vsub.f32 0.0, %v384
        %v392 = vsub.f32 0.0, %v385
        %v393 = vsub.f32 0.0, %v386
        %s394 = sadd.s32 %s24, %s25
        %s395 = smul.u32 %s394, 2
        %s396 = sadd.s32 %s395, 2
        %p397 = scmp.gt.s32.totalorder %s396, 2
        // Predicated region
        $region49: #{tpu_custom_call.1} parent=31 // pred_check
          %p398 = pneg %p397
        $region50: #{tpu_custom_call.1} parent=31 // pred_check_branch
          %400 = sbr.rel (%p398) target = $region52
        $region51: #{tpu_custom_call.1} parent=31 // pred_region
          %v401 = vlaneseq
          %v402 = vshrl.u32 %v401, 7
          %v403 = vstv %s395
          %v404 = vadd.s32 %v403, %v402
          %v405 = vld [vmem:[#allocation2] sm:$0xff]
          %v406 = vld [vmem:[#allocation2 + $0x8] sm:$0x3f]
          %vm407 = vcmp.lt.s32.totalorder %v404, 2
          %v408 = vsel %vm407, %v387, 0.0
          %v409 = vsel %vm407, %v388, 0.0
          %v410 = vsel %vm407, %v389, 0.0
          %v411 = vsel %vm407, %v390, 0.0
          %v412 = vsel %vm407, %v391, 0.0
          %v413 = vsel %vm407, %v392, 0.0
          %v414 = vsel %vm407, %v393, 0.0
          %v422 = vcombine.low %v408, %v409
          %v423 = vcombine.low %v410, %v411
          %v425 = vunpack.c.l.s4 1983009808
          %v426 = vunpack.c.0.s8 %v425
          %v427 = vlaneseq
          %v428 = vshrl.u32 %v427, 7
          %v429 = vsub.s32 %v426, %v428
          %v430 = vrot.slane %v422, %v429
          %v432 = vunpack.c.l.s4 1983009808
          %v433 = vunpack.c.0.s8 %v432
          %v434 = vlaneseq
          %v435 = vshrl.u32 %v434, 7
          %v436 = vsub.s32 %v433, %v435
          %v437 = vrot.slane %v423, %v436
          %v438 = vcombine.low %v430, %v437
          %v439 = vcombine.low %v412, %v413
          %v441 = vunpack.c.l.s4 1983009808
          %v442 = vunpack.c.0.s8 %v441
          %v443 = vlaneseq
          %v444 = vshrl.u32 %v443, 7
          %v445 = vsub.s32 %v442, %v444
          %v446 = vrot.slane %v439, %v445
          %v448 = vunpack.c.l.s4 1983009808
          %v449 = vunpack.c.0.s8 %v448
          %v450 = vlaneseq
          %v451 = vshrl.u32 %v450, 7
          %v452 = vsub.s32 %v449, %v451
          %v453 = vrot.slane %v414, %v452
          %v454 = vcombine.low %v446, %v453
          %v457 = vadd.f32 %v405, %v438
          %v458 = vadd.f32 %v406, %v454
          %459 = vst [vmem:[#allocation2] sm:$0xff] %v457
          %460 = vst [vmem:[#allocation2 + $0x8] sm:$0x3f] %v458
        $region52: #{tpu_custom_call.1} parent=31 // pred_fallthru
          _
        %p461 = scmp.le.s32.totalorder %s396, 2
        // Predicated region
        $region53: #{tpu_custom_call.1} parent=31 // pred_check
          %p462 = pneg %p461
        $region54: #{tpu_custom_call.1} parent=31 // pred_check_branch
          %464 = sbr.rel (%p462) target = $region56
        $region55: #{tpu_custom_call.1} parent=31 // pred_region
          %v465 = vld [vmem:[#allocation2] sm:$0xff]
          %v466 = vld [vmem:[#allocation2 + $0x8] sm:$0x3f]
          %v474 = vcombine.low %v387, %v388
          %v475 = vcombine.low %v389, %v390
          %v477 = vunpack.c.l.s4 1983009808
          %v478 = vunpack.c.0.s8 %v477
          %v479 = vlaneseq
          %v480 = vshrl.u32 %v479, 7
          %v481 = vsub.s32 %v478, %v480
          %v482 = vrot.slane %v474, %v481
          %v484 = vunpack.c.l.s4 1983009808
          %v485 = vunpack.c.0.s8 %v484
          %v486 = vlaneseq
          %v487 = vshrl.u32 %v486, 7
          %v488 = vsub.s32 %v485, %v487
          %v489 = vrot.slane %v475, %v488
          %v490 = vcombine.low %v482, %v489
          %v491 = vcombine.low %v391, %v392
          %v493 = vunpack.c.l.s4 1983009808
          %v494 = vunpack.c.0.s8 %v493
          %v495 = vlaneseq
          %v496 = vshrl.u32 %v495, 7
          %v497 = vsub.s32 %v494, %v496
          %v498 = vrot.slane %v491, %v497
          %v500 = vunpack.c.l.s4 1983009808
          %v501 = vunpack.c.0.s8 %v500
          %v502 = vlaneseq
          %v503 = vshrl.u32 %v502, 7
          %v504 = vsub.s32 %v501, %v503
          %v505 = vrot.slane %v393, %v504
          %v506 = vcombine.low %v498, %v505
          %v509 = vadd.f32 %v465, %v490
          %v510 = vadd.f32 %v466, %v506
          %511 = vst [vmem:[#allocation2] sm:$0xff] %v509
          %512 = vst [vmem:[#allocation2 + $0x8] sm:$0x3f] %v510
        $region56: #{tpu_custom_call.1} parent=31 // pred_fallthru
          _
        // Predicated region
        $region57: #{tpu_custom_call.1} parent=31 // pred_check
          %p513 = pneg %p271
        $region58: #{tpu_custom_call.1} parent=31 // pred_check_branch
          %515 = sbr.rel (%p513) target = $region60
        $region59: #{tpu_custom_call.1} parent=31 // pred_region
          %v516 = vld [vmem:[#allocation2] sm:$0xff]
          %v517 = vld [vmem:[#allocation2 + $0x8] sm:$0x3f]
          %v520 = vcombine.high %v516, %v516
          %v522 = vunpack.c.l.s4 1983009808
          %v523 = vunpack.c.0.s8 %v522
          %v524 = vlaneseq
          %v525 = vshrl.u32 %v524, 7
          %v526 = vsub.s32 %v523, %v525
          %v527 = vrot.slane %v516, %v526
          %v529 = vunpack.c.l.s4 1983009808
          %v530 = vunpack.c.0.s8 %v529
          %v531 = vlaneseq
          %v532 = vshrl.u32 %v531, 7
          %v533 = vsub.s32 %v530, %v532
          %v534 = vrot.slane %v520, %v533
          %v535 = vcombine.high %v527, %v527
          %v536 = vcombine.high %v534, %v534
          %v537 = vcombine.high %v517, %v517
          %v539 = vunpack.c.l.s4 1983009808
          %v540 = vunpack.c.0.s8 %v539
          %v541 = vlaneseq
          %v542 = vshrl.u32 %v541, 7
          %v543 = vsub.s32 %v540, %v542
          %v544 = vrot.slane %v517, %v543
          %v546 = vunpack.c.l.s4 1983009808
          %v547 = vunpack.c.0.s8 %v546
          %v548 = vlaneseq
          %v549 = vshrl.u32 %v548, 7
          %v550 = vsub.s32 %v547, %v549
          %v551 = vrot.slane %v537, %v550
          %v552 = vcombine.high %v544, %v544
          %vm560 = vcmask 1041408
          %v561 = vsel %vm560, %v527, 0.0
          %v562 = vsel %vm560, %v535, 0.0
          %v563 = vadd.f32 %v561, %v562
          %v564 = vsel %vm560, %v534, 0.0
          %v565 = vadd.f32 %v563, %v564
          %v566 = vsel %vm560, %v536, 0.0
          %v567 = vadd.f32 %v565, %v566
          %v568 = vsel %vm560, %v544, 0.0
          %v569 = vadd.f32 %v567, %v568
          %v570 = vsel %vm560, %v552, 0.0
          %v571 = vadd.f32 %v569, %v570
          %v572 = vsel %vm560, %v551, 0.0
          %v573 = vadd.f32 %v571, %v572
          %574 = vadd.xlane.f32.xlu0 %v573
          %v575 = vpop.xlane.xlu0 %574
          %v576 = vrot.slane %v575, 4
          %v577 = vadd.f32 %v575, %v576
          %v578 = vrot.slane %v577, 2
          %v579 = vadd.f32 %v577, %v578
          %v580 = vrot.slane %v579, 1
          %v581 = vadd.f32 %v579, %v580
          %s582 = vtos %v581
          %v583 = vstv %s582
          %vm584 = vcmask 0
          %585 = vst.msk [vmem:[%s270] sm:$0x1] %vm584, %v583
        $region60: #{tpu_custom_call.1} parent=31 // pred_fallthru
          _
        %p586 = scmp.lt.s32.totalorder %s24, 1
        %s587 = scalar_select %p586, %s24, 1
        %s588 = scalar_lea.vmem %s3, %s587
        // Predicated region
        $region61: #{tpu_custom_call.1} parent=31 // pred_check
          %p589 = pneg %p135
        $region62: #{tpu_custom_call.1} parent=31 // pred_check_branch
          %591 = sbr.rel (%p589) target = $region64
        $region63: #{tpu_custom_call.1} parent=31 // pred_region
          _
        $region64: #{tpu_custom_call.1} parent=31 // pred_fallthru
          _
      $region32: #{tpu_custom_call.1} parent=5 // pred_fallthru
        _
      %p592 = scmp.le.s32.totalorder 2, %s15
      // Predicated region
      $region65: #{tpu_custom_call.1} parent=5 // pred_check
        %p593 = pneg %p592
      $region66: #{tpu_custom_call.1} parent=5 // pred_check_branch
        %595 = sbr.rel (%p593) target = $region68
      $region67: #{tpu_custom_call.1} parent=5 // pred_region
        %s596 = ssub.s32 %s15, 2
        // Predicated region
        $region69: #{tpu_custom_call.1} parent=67 // pred_check
          %p597 = pneg %p141
        $region70: #{tpu_custom_call.1} parent=67 // pred_check_branch
          %599 = sbr.rel (%p597) target = $region72
        $region71: #{tpu_custom_call.1} parent=67 // pred_region
          %p600 = scmp.lt.s32.totalorder %s26, 1
          %s601 = scalar_select %p600, %s26, 1
          %s602 = scalar_lea.vmem %s3, %s601
        $region72: #{tpu_custom_call.1} parent=67 // pred_fallthru
          _
      $region68: #{tpu_custom_call.1} parent=5 // pred_fallthru
        _
    $region6: #{tpu_custom_call.1} parent=1 // loop_footer
      %s19 = sadd.s32 1, %s15
    $region7: #{tpu_custom_call.1} parent=1 // loop_footer_branch
      %14 = sbr.rel target = $region3
    $region8: #{tpu_custom_call.1} parent=1 // loop_exit
      _
    %603 = vsyncpa [#allocation4], 1
    %s604 = scalar_lea.sflag [#allocation4], 1
    %605 = vsyncpa %s604, 1
    %606 = vsyncpa [#allocation6], 1
    %s607 = scalar_lea.sflag [#allocation6], 1
    %608 = vsyncpa %s607, 1

</llo_original>
